<compile_context>
chip_gen: v5e
topology: v5e:2x2
jax: 0.10.0
libtpu: 0.0.40
codegen_flags: <defaults>
</compile_context>

<pallas_src>
import numpy as np
import jax
import jax.numpy as jnp
from jax.experimental import pallas as pl
from jax.experimental.pallas import tpu as pltpu


# --------------------------------------------------------------------------- #
# Kernel
# --------------------------------------------------------------------------- #
def _make_kernel(n_splits):
    f32 = jnp.float32

    def kernel(x_ref, sy_ref, scb_ref, scr_ref, y_ref, cb_ref, cr_ref):
        # x_ref  : (2*TR, 6*TC)  -- 2*TR image rows, lanes = [Y Cb Cr] interleaved
        # sy_ref : (6*TC, 2*TC)  bf16 0/1: lane 3u          -> Y column u
        # scb_ref: (6*TC,   TC)  bf16 0/1: lanes 6j+1, 6j+4 -> Cb column j
        # scr_ref: (6*TC,   TC)  bf16 0/1: lanes 6j+2, 6j+5 -> Cr column j
        # y_ref  : (2*TR, 2*TC); cb_ref / cr_ref : (TR, TC)
        tr = cb_ref.shape[0]

        def split(v):
            # Exact decomposition of the f32 data into n_splits bf16 planes so the
            # selection matmuls below are plain bf16 MXU passes (f32 accumulate)
            # and remain exact (matrix entries are only 0/1).
            parts = []
            for _ in range(n_splits - 1):
                p = v.astype(jnp.bfloat16)
                parts.append(p)
                v = v - p.astype(f32)
            parts.append(v.astype(jnp.bfloat16))
            return parts

        def select(parts, s_ref):
            s = s_ref[...]
            acc = jnp.dot(parts[0], s, preferred_element_type=f32)
            for p in parts[1:]:
                acc = acc + jnp.dot(p, s, preferred_element_type=f32)
            return acc

        # Y: pure lane de-interleave of channel 0 (exact copy to ~1 ulp).
        xs = split(x_ref[...].astype(f32))
        y_ref[...] = select(xs, sy_ref).astype(y_ref.dtype)

        # Chroma: row-pair sum on the VPU via sublane-strided loads, then the
        # column-pair sum + channel de-interleave as one MXU selection matmul.
        row_sum = (x_ref[pl.ds(0, tr, stride=2), :].astype(f32)
                   + x_ref[pl.ds(1, tr, stride=2), :].astype(f32))
        rs = split(row_sum)
        cb_ref[...] = (0.25 * select(rs, scb_ref)).astype(cb_ref.dtype)
        cr_ref[...] = (0.25 * select(rs, scr_ref)).astype(cr_ref.dtype)

    return kernel


# --------------------------------------------------------------------------- #
# Wrapper helpers
# --------------------------------------------------------------------------- #
def _selection_matrices(tc):
    """Constant 0/1 de-interleave / column-pool matrices for one column tile.

    Local lane l = 3*u + c  (u: full-res column within the tile, c: 0=Y,1=Cb,2=Cr).
    """
    k = 6 * tc
    u = np.arange(2 * tc)
    j = np.arange(tc)
    sy = np.zeros((k, 2 * tc), np.float32)
    sy[3 * u, u] = 1.0
    scb = np.zeros((k, tc), np.float32)
    scb[6 * j + 1, j] = 1.0
    scb[6 * j + 4, j] = 1.0
    scr = np.zeros((k, tc), np.float32)
    scr[6 * j + 2, j] = 1.0
    scr[6 * j + 5, j] = 1.0
    bf = jnp.bfloat16
    return jnp.asarray(sy, bf), jnp.asarray(scb, bf), jnp.asarray(scr, bf)


def _pick_col_tile(w2):
    """Chroma output columns per grid step.

    Must be a multiple of 128 (lane-dense stores, (8,128)-legal) AND divide w2
    exactly -- a partial column tile would let the selection matmul touch
    uninitialised padding lanes.  Small widths use the full width (always legal).
    """
    if w2 % 128 == 0:
        return 128
    if w2 <= 256:
        return w2
    return None   # awkward width -> pure-JAX fallback


def _pick_row_tile(h2, tc, itemsize, batch, n_col_tiles):
    """Chroma rows per grid step (input rows per step = 2*tr). Dtype-aware."""
    sub = max(8, 32 // itemsize)          # sublane multiple: 8 f32, 16 bf16, 32 int8
    if h2 <= sub:
        return h2
    # Double-buffered VMEM per chroma row: input 12*tc + y 4*tc + cb/cr 2*tc elems.
    budget = 12 * 1024 * 1024
    tr = budget // (2 * 18 * tc * itemsize)
    tr = max(sub, min(tr, 256, h2)) // sub * sub
    # Keep >= ~8 pipelined grid steps (hides prologue/epilogue DMA, feeds both
    # v7x TensorCores on small-batch inputs).
    while tr > sub and batch * pl.cdiv(h2, tr) * n_col_tiles < 8:
        tr = max(sub, (tr // 2) // sub * sub)
    return tr


def _jnp_fallback(image):
    # TODO(synk): odd spatial sizes, widths with no 128-friendly tiling and
    # non-float dtypes take this pure-JAX path instead of the Pallas kernel.
    B, H, W, _ = image.shape
    h2, w2 = H // 2, W // 2
    y = image[..., 0]
    c = image[:, : 2 * h2, : 2 * w2, 1:3].astype(jnp.float32)
    c = c.reshape(B, h2, 2, w2, 2, 2).mean(axis=(2, 4)).astype(image.dtype)
    return y, c[..., 0], c[..., 1]


# --------------------------------------------------------------------------- #
# Public entry point
# --------------------------------------------------------------------------- #
@jax.jit
def chroma_subsampling(image):
    """image: (B, H, W, 3) -> (y (B,H,W), cb (B,H//2,W//2), cr (B,H//2,W//2))."""
    B, H, W, C = image.shape
    assert C == 3
    dt = image.dtype
    if (H % 2) or (W % 2) or not jnp.issubdtype(dt, jnp.floating):
        return _jnp_fallback(image)

    h2, w2 = H // 2, W // 2
    tc = _pick_col_tile(w2)
    if tc is None:
        return _jnp_fallback(image)

    itemsize = jnp.dtype(dt).itemsize
    n_splits = 3 if itemsize >= 4 else 2          # f32 needs 3 exact bf16 planes
    n_ct = w2 // tc
    tr = _pick_row_tile(h2, tc, itemsize, B, n_ct)
    grid = (B, pl.cdiv(h2, tr), n_ct)

    # Free reshape (minor-dim merge): the kernel reads the image straight from
    # its original channel-interleaved layout -- no wrapper re-layout pass.
    xflat = image.reshape(B, H, 3 * W)
    sy, scb, scr = _selection_matrices(tc)

    return pl.pallas_call(
        _make_kernel(n_splits),
        out_shape=(
            jax.ShapeDtypeStruct((B, H, W), dt),
            jax.ShapeDtypeStruct((B, h2, w2), dt),
            jax.ShapeDtypeStruct((B, h2, w2), dt),
        ),
        grid_spec=pltpu.PrefetchScalarGridSpec(
            num_scalar_prefetch=0,
            grid=grid,
            in_specs=[
                pl.BlockSpec((None, 2 * tr, 6 * tc), lambda b, i, j: (b, i, j)),
                pl.BlockSpec((6 * tc, 2 * tc), lambda b, i, j: (0, 0)),
                pl.BlockSpec((6 * tc, tc), lambda b, i, j: (0, 0)),
                pl.BlockSpec((6 * tc, tc), lambda b, i, j: (0, 0)),
            ],
            out_specs=[
                pl.BlockSpec((None, 2 * tr, 2 * tc), lambda b, i, j: (b, i, j)),
                pl.BlockSpec((None, tr, tc), lambda b, i, j: (b, i, j)),
                pl.BlockSpec((None, tr, tc), lambda b, i, j: (b, i, j)),
            ],
        ),
        compiler_params=pltpu.CompilerParams(
            dimension_semantics=("parallel", "parallel", "parallel"),
            vmem_limit_bytes=32 * 1024 * 1024,     # safe on v5e / v6e / v7x
        ),
    )(xflat, sy, scb, scr)


# --------------------------------------------------------------------------- #
# Self-test
# --------------------------------------------------------------------------- #
def _reference(image):
    B, H, W, _ = image.shape
    h2, w2 = H // 2, W // 2
    y = image[..., 0]
    c = image[:, : 2 * h2, : 2 * w2, 1:3].astype(jnp.float32)
    c = c.reshape(B, h2, 2, w2, 2, 2).mean(axis=(2, 4))
    return y, c[..., 0].astype(image.dtype), c[..., 1].astype(image.dtype)


def _check(image):
    y, cb, cr = jax.block_until_ready(chroma_subsampling(image))
    y_r, cb_r, cr_r = _reference(image)
    B, H, W, _ = image.shape
    assert y.shape == (B, H, W)
    assert cb.shape == (B, H // 2, W // 2) and cr.shape == (B, H // 2, W // 2)
    np.testing.assert_allclose(np.asarray(y), np.asarray(y_r), rtol=1e-5, atol=1e-4)
    np.testing.assert_allclose(np.asarray(cb), np.asarray(cb_r), rtol=1e-5, atol=1e-3)
    np.testing.assert_allclose(np.asarray(cr), np.asarray(cr_r), rtol=1e-5, atol=1e-3)


if __name__ == "__main__":
    key = jax.random.PRNGKey(0)
    k0, k1, k2 = jax.random.split(key, 3)

    # Primary small example (YCbCr-like values in [0, 255]).
    _check(jax.random.uniform(k0, (2, 16, 16, 3), dtype=jnp.float32) * 255.0)
    # Row-tile tail block (h2 % tr != 0): exercises the masked-tail path.
    _check(jax.random.uniform(k1, (1, 40, 24, 3), dtype=jnp.float32) * 255.0)
    # Odd spatial sizes: floor pooling via the fallback path.
    _check(jax.random.uniform(k2, (1, 9, 7, 3), dtype=jnp.float32) * 255.0)

    print("KERNEL_OK")
</pallas_src>

<mosaic_0001>
module attributes {stable_mosaic.version = 11 : i64} {
  func.func @kernel(%arg0: i32, %arg1: i32, %arg2: i32, %arg3: memref<1x16x48xf32, #tpu.memory_space<vmem>>, %arg4: memref<48x16xbf16, #tpu.memory_space<vmem>>, %arg5: memref<48x8xbf16, #tpu.memory_space<vmem>>, %arg6: memref<48x8xbf16, #tpu.memory_space<vmem>>, %arg7: memref<1x16x16xf32, #tpu.memory_space<vmem>>, %arg8: memref<1x8x8xf32, #tpu.memory_space<vmem>>, %arg9: memref<1x8x8xf32, #tpu.memory_space<vmem>>) attributes {dimension_semantics = [#tpu.dimension_semantics<parallel>, #tpu.dimension_semantics<parallel>, #tpu.dimension_semantics<parallel>], iteration_bounds = array<i64: 2, 1, 1>, scalar_prefetch = 0 : i64, scratch_operands = 0 : i64, tpu.core_type = #tpu.core_type<tc>, window_params = [{transform_indices = @transform_0, window_bounds = array<i64: 1, 16, 48>}, {pipeline_mode = #tpu.pipeline_mode<synchronous>, transform_indices = @transform_1, window_bounds = array<i64: 48, 16>}, {pipeline_mode = #tpu.pipeline_mode<synchronous>, transform_indices = @transform_2, window_bounds = array<i64: 48, 8>}, {pipeline_mode = #tpu.pipeline_mode<synchronous>, transform_indices = @transform_3, window_bounds = array<i64: 48, 8>}, {transform_indices = @transform_4, window_bounds = array<i64: 1, 16, 16>}, {transform_indices = @transform_5, window_bounds = array<i64: 1, 8, 8>}, {transform_indices = @transform_6, window_bounds = array<i64: 1, 8, 8>}]} {
    %c0 = arith.constant 0 : index
    %c0_0 = arith.constant 0 : index
    %c0_1 = arith.constant 0 : index
    %0 = vector.load %arg3[%c0, %c0_0, %c0_1] : memref<1x16x48xf32, #tpu.memory_space<vmem>>, vector<1x16x48xf32>
    %1 = vector.shape_cast %0 : vector<1x16x48xf32> to vector<16x48xf32>
    %2 = arith.truncf %1 : vector<16x48xf32> to vector<16x48xbf16>
    %3 = arith.extf %2 : vector<16x48xbf16> to vector<16x48xf32>
    %4 = arith.subf %1, %3 : vector<16x48xf32>
    %5 = arith.truncf %4 : vector<16x48xf32> to vector<16x48xbf16>
    %6 = arith.extf %5 : vector<16x48xbf16> to vector<16x48xf32>
    %7 = arith.subf %4, %6 : vector<16x48xf32>
    %8 = arith.truncf %7 : vector<16x48xf32> to vector<16x48xbf16>
    %c0_2 = arith.constant 0 : index
    %c0_3 = arith.constant 0 : index
    %9 = vector.load %arg4[%c0_2, %c0_3] : memref<48x16xbf16, #tpu.memory_space<vmem>>, vector<48x16xbf16>
    %cst = arith.constant dense<0.000000e+00> : vector<16x16xf32>
    %10 = tpu.matmul %2, %9, %cst {dimension_numbers = #tpu.dot_dimension_numbers<[1], [0], [0], [1], [0, 0, 1, 1], [], []>} : vector<16x48xbf16>, vector<48x16xbf16>, vector<16x16xf32> -> vector<16x16xf32>
    %cst_4 = arith.constant dense<0.000000e+00> : vector<16x16xf32>
    %11 = tpu.matmul %5, %9, %cst_4 {dimension_numbers = #tpu.dot_dimension_numbers<[1], [0], [0], [1], [0, 0, 1, 1], [], []>} : vector<16x48xbf16>, vector<48x16xbf16>, vector<16x16xf32> -> vector<16x16xf32>
    %12 = arith.addf %10, %11 : vector<16x16xf32>
    %cst_5 = arith.constant dense<0.000000e+00> : vector<16x16xf32>
    %13 = tpu.matmul %8, %9, %cst_5 {dimension_numbers = #tpu.dot_dimension_numbers<[1], [0], [0], [1], [0, 0, 1, 1], [], []>} : vector<16x48xbf16>, vector<48x16xbf16>, vector<16x16xf32> -> vector<16x16xf32>
    %14 = arith.addf %12, %13 : vector<16x16xf32>
    %c0_6 = arith.constant 0 : index
    %c0_7 = arith.constant 0 : index
    %c0_8 = arith.constant 0 : index
    %15 = vector.load %arg7[%c0_6, %c0_7, %c0_8] : memref<1x16x16xf32, #tpu.memory_space<vmem>>, vector<1x16x16xf32>
    %16 = vector.shape_cast %15 : vector<1x16x16xf32> to vector<16x16xf32>
    %17 = vector.shape_cast %14 : vector<16x16xf32> to vector<1x16x16xf32>
    tpu.vector_store %arg7[%c0_6, %c0_7, %c0_8], %17 {strides = array<i32>} : memref<1x16x16xf32, #tpu.memory_space<vmem>>, vector<1x16x16xf32>,
    %c0_9 = arith.constant 0 : index
    %c0_10 = arith.constant 0 : index
    %c0_11 = arith.constant 0 : index
    %18 = tpu.strided_load %arg3[%c0_9, %c0_10, %c0_11] {strides = array<i32: 1, 2, 1>} : memref<1x16x48xf32, #tpu.memory_space<vmem>>, vector<1x8x48xf32>
    %19 = vector.shape_cast %18 : vector<1x8x48xf32> to vector<8x48xf32>
    %c0_12 = arith.constant 0 : index
    %c1 = arith.constant 1 : index
    %c0_13 = arith.constant 0 : index
    %20 = tpu.strided_load %arg3[%c0_12, %c1, %c0_13] {strides = array<i32: 1, 2, 1>} : memref<1x16x48xf32, #tpu.memory_space<vmem>>, vector<1x8x48xf32>
    %21 = vector.shape_cast %20 : vector<1x8x48xf32> to vector<8x48xf32>
    %22 = arith.addf %19, %21 : vector<8x48xf32>
    %23 = arith.truncf %22 : vector<8x48xf32> to vector<8x48xbf16>
    %24 = arith.extf %23 : vector<8x48xbf16> to vector<8x48xf32>
    %25 = arith.subf %22, %24 : vector<8x48xf32>
    %26 = arith.truncf %25 : vector<8x48xf32> to vector<8x48xbf16>
    %27 = arith.extf %26 : vector<8x48xbf16> to vector<8x48xf32>
    %28 = arith.subf %25, %27 : vector<8x48xf32>
    %29 = arith.truncf %28 : vector<8x48xf32> to vector<8x48xbf16>
    %c0_14 = arith.constant 0 : index
    %c0_15 = arith.constant 0 : index
    %30 = vector.load %arg5[%c0_14, %c0_15] : memref<48x8xbf16, #tpu.memory_space<vmem>>, vector<48x8xbf16>
    %cst_16 = arith.constant dense<0.000000e+00> : vector<8x8xf32>
    %31 = tpu.matmul %23, %30, %cst_16 {dimension_numbers = #tpu.dot_dimension_numbers<[1], [0], [0], [1], [0, 0, 1, 1], [], []>} : vector<8x48xbf16>, vector<48x8xbf16>, vector<8x8xf32> -> vector<8x8xf32>
    %cst_17 = arith.constant dense<0.000000e+00> : vector<8x8xf32>
    %32 = tpu.matmul %26, %30, %cst_17 {dimension_numbers = #tpu.dot_dimension_numbers<[1], [0], [0], [1], [0, 0, 1, 1], [], []>} : vector<8x48xbf16>, vector<48x8xbf16>, vector<8x8xf32> -> vector<8x8xf32>
    %33 = arith.addf %31, %32 : vector<8x8xf32>
    %cst_18 = arith.constant dense<0.000000e+00> : vector<8x8xf32>
    %34 = tpu.matmul %29, %30, %cst_18 {dimension_numbers = #tpu.dot_dimension_numbers<[1], [0], [0], [1], [0, 0, 1, 1], [], []>} : vector<8x48xbf16>, vector<48x8xbf16>, vector<8x8xf32> -> vector<8x8xf32>
    %35 = arith.addf %33, %34 : vector<8x8xf32>
    %cst_19 = arith.constant 2.500000e-01 : f32
    %36 = vector.broadcast %cst_19 : f32 to vector<8x8xf32>
    %37 = arith.mulf %36, %35 : vector<8x8xf32>
    %c0_20 = arith.constant 0 : index
    %c0_21 = arith.constant 0 : index
    %c0_22 = arith.constant 0 : index
    %38 = vector.load %arg8[%c0_20, %c0_21, %c0_22] : memref<1x8x8xf32, #tpu.memory_space<vmem>>, vector<1x8x8xf32>
    %39 = vector.shape_cast %38 : vector<1x8x8xf32> to vector<8x8xf32>
    %40 = vector.shape_cast %37 : vector<8x8xf32> to vector<1x8x8xf32>
    tpu.vector_store %arg8[%c0_20, %c0_21, %c0_22], %40 {strides = array<i32>} : memref<1x8x8xf32, #tpu.memory_space<vmem>>, vector<1x8x8xf32>,
    %c0_23 = arith.constant 0 : index
    %c0_24 = arith.constant 0 : index
    %41 = vector.load %arg6[%c0_23, %c0_24] : memref<48x8xbf16, #tpu.memory_space<vmem>>, vector<48x8xbf16>
    %cst_25 = arith.constant dense<0.000000e+00> : vector<8x8xf32>
    %42 = tpu.matmul %23, %41, %cst_25 {dimension_numbers = #tpu.dot_dimension_numbers<[1], [0], [0], [1], [0, 0, 1, 1], [], []>} : vector<8x48xbf16>, vector<48x8xbf16>, vector<8x8xf32> -> vector<8x8xf32>
    %cst_26 = arith.constant dense<0.000000e+00> : vector<8x8xf32>
    %43 = tpu.matmul %26, %41, %cst_26 {dimension_numbers = #tpu.dot_dimension_numbers<[1], [0], [0], [1], [0, 0, 1, 1], [], []>} : vector<8x48xbf16>, vector<48x8xbf16>, vector<8x8xf32> -> vector<8x8xf32>
    %44 = arith.addf %42, %43 : vector<8x8xf32>
    %cst_27 = arith.constant dense<0.000000e+00> : vector<8x8xf32>
    %45 = tpu.matmul %29, %41, %cst_27 {dimension_numbers = #tpu.dot_dimension_numbers<[1], [0], [0], [1], [0, 0, 1, 1], [], []>} : vector<8x48xbf16>, vector<48x8xbf16>, vector<8x8xf32> -> vector<8x8xf32>
    %46 = arith.addf %44, %45 : vector<8x8xf32>
    %cst_28 = arith.constant 2.500000e-01 : f32
    %47 = vector.broadcast %cst_28 : f32 to vector<8x8xf32>
    %48 = arith.mulf %47, %46 : vector<8x8xf32>
    %c0_29 = arith.constant 0 : index
    %c0_30 = arith.constant 0 : index
    %c0_31 = arith.constant 0 : index
    %49 = vector.load %arg9[%c0_29, %c0_30, %c0_31] : memref<1x8x8xf32, #tpu.memory_space<vmem>>, vector<1x8x8xf32>
    %50 = vector.shape_cast %49 : vector<1x8x8xf32> to vector<8x8xf32>
    %51 = vector.shape_cast %48 : vector<8x8xf32> to vector<1x8x8xf32>
    tpu.vector_store %arg9[%c0_29, %c0_30, %c0_31], %51 {strides = array<i32>} : memref<1x8x8xf32, #tpu.memory_space<vmem>>, vector<1x8x8xf32>,
    return
  }
  func.func @transform_0(%arg0: i32, %arg1: i32, %arg2: i32) -> (i32, i32, i32) {
    %c0_i32 = arith.constant 0 : i32
    return %arg0, %arg1, %arg2 : i32, i32, i32
  }
  func.func @transform_1(%arg0: i32, %arg1: i32, %arg2: i32) -> (i32, i32) {
    %c0_i32 = arith.constant 0 : i32
    %c0_i32_0 = arith.constant 0 : i32
    %c0_i32_1 = arith.constant 0 : i32
    return %c0_i32, %c0_i32_0 : i32, i32
  }
  func.func @transform_2(%arg0: i32, %arg1: i32, %arg2: i32) -> (i32, i32) {
    %c0_i32 = arith.constant 0 : i32
    %c0_i32_0 = arith.constant 0 : i32
    %c0_i32_1 = arith.constant 0 : i32
    return %c0_i32, %c0_i32_0 : i32, i32
  }
  func.func @transform_3(%arg0: i32, %arg1: i32, %arg2: i32) -> (i32, i32) {
    %c0_i32 = arith.constant 0 : i32
    %c0_i32_0 = arith.constant 0 : i32
    %c0_i32_1 = arith.constant 0 : i32
    return %c0_i32, %c0_i32_0 : i32, i32
  }
  func.func @transform_4(%arg0: i32, %arg1: i32, %arg2: i32) -> (i32, i32, i32) {
    %c0_i32 = arith.constant 0 : i32
    return %arg0, %arg1, %arg2 : i32, i32, i32
  }
  func.func @transform_5(%arg0: i32, %arg1: i32, %arg2: i32) -> (i32, i32, i32) {
    %c0_i32 = arith.constant 0 : i32
    return %arg0, %arg1, %arg2 : i32, i32, i32
  }
  func.func @transform_6(%arg0: i32, %arg1: i32, %arg2: i32) -> (i32, i32, i32) {
    %c0_i32 = arith.constant 0 : i32
    return %arg0, %arg1, %arg2 : i32, i32, i32
  }
}

</mosaic_0001>

<llo_original>
// kernel: chroma_subsampling.1
$region0: #{chroma_subsampling.1}
  #allocation0 [shape = 'u32[]', space=smem, size = 0x4, offset = 0x4, fixed_abs, tag = 'smem constant byte address 0x4 - core index']
  #allocation1 [shape = 'u32[72,128]{1,0:T(1,128)}', space=vmem, size = 0x9000, scoped, tag = 'internal scratch']
  %s0 = inlined_call_operand.vmem [shape: f32[2,16,48], index: 0, kind: input, shape index: {}]
  %s1 = inlined_call_operand.vmem [shape: bf16[48,16], index: 1, kind: input, shape index: {}]
  %s2 = inlined_call_operand.vmem [shape: bf16[48,8], index: 2, kind: input, shape index: {}]
  %s3 = inlined_call_operand.vmem [shape: bf16[48,8], index: 3, kind: input, shape index: {}]
  %s4 = inlined_call_operand.hbm [shape: f32[2,16,16], index: 4, kind: output, shape index: {0}]
  %s5 = inlined_call_operand.hbm [shape: f32[2,8,8], index: 5, kind: output, shape index: {1}]
  %s6 = inlined_call_operand.hbm [shape: f32[2,8,8], index: 6, kind: output, shape index: {2}]
  %7 = xla_tuple %s4, %s5, %s6
  %s8 = sld [smem:[#allocation0]]
  $region65: #{chroma_subsampling.1} parent=0
    _
  %s10 = ssub.s32 1, %s8
  %s11 = scalar_select 0, %s10, %s8
  $region1: #{chroma_subsampling.1} parent=0
    #allocation2 [shape = 'u8[16384]{0}', space=vmem, size = 0x4000, scoped, tag = 'output window, operand 0']
    #allocation3 [shape = 's32[2]{0}', space=sflag, size = 0x8, scoped, tag = 'scoped memory for chroma_subsampling.1']
    #allocation4 [shape = 'u8[8192]{0}', space=vmem, size = 0x2000, scoped, tag = 'output window, operand 1']
    #allocation5 [shape = 's32[2]{0}', space=sflag, size = 0x8, scoped, tag = 'scoped memory for chroma_subsampling.1']
    #allocation6 [shape = 'u8[8192]{0}', space=vmem, size = 0x2000, scoped, tag = 'output window, operand 2']
    %12 = vsyncpa [#allocation3], 0
    %s13 = scalar_lea.sflag [#allocation3], 1
    %14 = vsyncpa %s13, 0
    %15 = vsyncpa [#allocation5], 0
    %s16 = scalar_lea.sflag [#allocation5], 1
    %17 = vsyncpa %s16, 0
    loop: start=0, step=1, limit=4
    $region2: #{chroma_subsampling.1} parent=1 // loop_pre_header
      _
    $region3: #{chroma_subsampling.1} parent=1 // loop_header
      %s19 = sphi 0, %s23
      %p20 = scmp.ge.s32.totalorder %s19, 4
      %s26 = sphi 0, %s45
      %s27 = sphi 0, %s41
      %s28 = sphi 0, %s37
      %s29 = sphi 0, %s26
      %s30 = sphi 0, %s27
      %s31 = sphi 0, %s28
      %s32 = sphi 0, %s29
      %s33 = sphi 0, %s30
      %s34 = sphi 0, %s31
      %s52 = sphi 0, %s54
      %s55 = sphi 0, %s52
      %s56 = sphi 0, %s55
      %s72 = sphi 0, %s56
      %s76 = sphi 0, %s76
      %s78 = sphi 0, %s76
      %s79 = sphi 0, %s78
      %s93 = sphi 0, %s79
      %s97 = sphi 0, %s97
      %s99 = sphi 0, %s97
      %s100 = sphi 0, %s99
      %s114 = sphi 0, %s100
      %s118 = sphi 0, %s118
      %s120 = sphi 0, %s118
      %s121 = sphi 0, %s120
      %s135 = sphi 0, %s121
      %s145 = sphi 0, %s147
      %s148 = sphi 0, %s145
      %s149 = sphi 0, %s148
      %s165 = sphi 0, %s149
      %s175 = sphi 0, %s177
      %s178 = sphi 0, %s175
      %s179 = sphi 0, %s178
      %s195 = sphi 0, %s179
      %s205 = sphi 0, %s207
      %s208 = sphi 0, %s205
      %s209 = sphi 0, %s208
      %s225 = sphi 0, %s209
    $region4: #{chroma_subsampling.1} parent=1 // loop_header_branch
      %22 = sbr.rel (%p20) target = $region8
    $region5: #{chroma_subsampling.1} parent=1 // loop_body
      %s24 = ssub.s32 %s19, 1
      %s25 = ssub.s32 %s19, 2
      %s35 = sadd.s32 1, %s28
      %p36 = scmp.ge.s32.totalorder %s35, 1
      %s37 = scalar_select %p36, 0, %s35
      %s38 = sadd.s32 1, %s27
      %s39 = scalar_select %p36, %s38, %s27
      %p40 = scmp.ge.s32.totalorder %s39, 1
      %s41 = scalar_select %p40, 0, %s39
      %s42 = sadd.s32 1, %s26
      %s43 = scalar_select %p40, %s42, %s26
      %p44 = scmp.ge.s32.totalorder %s43, 2
      %s45 = scalar_select %p44, 0, %s43
      %s46 = ssub.s32 %s26, %s45
      %s47 = ssub.s32 %s27, %s41
      %s48 = sor.u32 %s46, %s47
      %s49 = ssub.s32 %s28, %s37
      %s50 = sor.u32 %s48, %s49
      %p51 = scmp.eq.s32.totalorder %s50, 0
      %s53 = sadd.s32 %s52, 1
      %s54 = scalar_select %p51, %s52, %s53
      %p57 = pneg %p51
      %p58 = scmp.eq.s32.totalorder %s19, 1
      %p59 = por %p57, %p58
      %p60 = scmp.ne.s32.totalorder %s52, %s55
      %p61 = scmp.eq.s32.totalorder %s19, 0
      %p62 = por %p60, %p61
      %p63 = scmp.ne.s32.totalorder %s52, %s55
      %p64 = scmp.eq.s32.totalorder %s24, 1
      %p65 = por %p63, %p64
      %p66 = scmp.ne.s32.totalorder %s55, %s56
      %p67 = scmp.eq.s32.totalorder %s24, 0
      %p68 = por %p66, %p67
      %p69 = scmp.ne.s32.totalorder %s55, %s56
      %p70 = scmp.eq.s32.totalorder %s25, 1
      %p71 = por %p69, %p70
      %p73 = scmp.ne.s32.totalorder %s56, %s72
      %p74 = scmp.eq.s32.totalorder %s25, 0
      %p75 = por %p73, %p74
      %s77 = sadd.s32 %s76, 1
      %p80 = scmp.eq.s32.totalorder %s19, 1
      %p81 = scmp.ne.s32.totalorder %s76, %s78
      %p82 = scmp.eq.s32.totalorder %s19, 0
      %p83 = por %p81, %p82
      %p84 = scmp.ne.s32.totalorder %s76, %s78
      %p85 = scmp.eq.s32.totalorder %s24, 1
      %p86 = por %p84, %p85
      %p87 = scmp.ne.s32.totalorder %s78, %s79
      %p88 = scmp.eq.s32.totalorder %s24, 0
      %p89 = por %p87, %p88
      %p90 = scmp.ne.s32.totalorder %s78, %s79
      %p91 = scmp.eq.s32.totalorder %s25, 1
      %p92 = por %p90, %p91
      %p94 = scmp.ne.s32.totalorder %s79, %s93
      %p95 = scmp.eq.s32.totalorder %s25, 0
      %p96 = por %p94, %p95
      %s98 = sadd.s32 %s97, 1
      %p101 = scmp.eq.s32.totalorder %s19, 1
      %p102 = scmp.ne.s32.totalorder %s97, %s99
      %p103 = scmp.eq.s32.totalorder %s19, 0
      %p104 = por %p102, %p103
      %p105 = scmp.ne.s32.totalorder %s97, %s99
      %p106 = scmp.eq.s32.totalorder %s24, 1
      %p107 = por %p105, %p106
      %p108 = scmp.ne.s32.totalorder %s99, %s100
      %p109 = scmp.eq.s32.totalorder %s24, 0
      %p110 = por %p108, %p109
      %p111 = scmp.ne.s32.totalorder %s99, %s100
      %p112 = scmp.eq.s32.totalorder %s25, 1
      %p113 = por %p111, %p112
      %p115 = scmp.ne.s32.totalorder %s100, %s114
      %p116 = scmp.eq.s32.totalorder %s25, 0
      %p117 = por %p115, %p116
      %s119 = sadd.s32 %s118, 1
      %p122 = scmp.eq.s32.totalorder %s19, 1
      %p123 = scmp.ne.s32.totalorder %s118, %s120
      %p124 = scmp.eq.s32.totalorder %s19, 0
      %p125 = por %p123, %p124
      %p126 = scmp.ne.s32.totalorder %s118, %s120
      %p127 = scmp.eq.s32.totalorder %s24, 1
      %p128 = por %p126, %p127
      %p129 = scmp.ne.s32.totalorder %s120, %s121
      %p130 = scmp.eq.s32.totalorder %s24, 0
      %p131 = por %p129, %p130
      %p132 = scmp.ne.s32.totalorder %s120, %s121
      %p133 = scmp.eq.s32.totalorder %s25, 1
      %p134 = por %p132, %p133
      %p136 = scmp.ne.s32.totalorder %s121, %s135
      %p137 = scmp.eq.s32.totalorder %s25, 0
      %p138 = por %p136, %p137
      %s139 = ssub.s32 %s26, %s45
      %s140 = ssub.s32 %s27, %s41
      %s141 = sor.u32 %s139, %s140
      %s142 = ssub.s32 %s28, %s37
      %s143 = sor.u32 %s141, %s142
      %p144 = scmp.eq.s32.totalorder %s143, 0
      %s146 = sadd.s32 %s145, 1
      %s147 = scalar_select %p144, %s145, %s146
      %p150 = pneg %p144
      %p151 = scmp.eq.s32.totalorder %s19, 1
      %p152 = por %p150, %p151
      %p153 = scmp.ne.s32.totalorder %s145, %s148
      %p154 = scmp.eq.s32.totalorder %s19, 0
      %p155 = por %p153, %p154
      %p156 = scmp.ne.s32.totalorder %s145, %s148
      %p157 = scmp.eq.s32.totalorder %s24, 1
      %p158 = por %p156, %p157
      %p159 = scmp.ne.s32.totalorder %s148, %s149
      %p160 = scmp.eq.s32.totalorder %s24, 0
      %p161 = por %p159, %p160
      %p162 = scmp.ne.s32.totalorder %s148, %s149
      %p163 = scmp.eq.s32.totalorder %s25, 1
      %p164 = por %p162, %p163
      %p166 = scmp.ne.s32.totalorder %s149, %s165
      %p167 = scmp.eq.s32.totalorder %s25, 0
      %p168 = por %p166, %p167
      %s169 = ssub.s32 %s26, %s45
      %s170 = ssub.s32 %s27, %s41
      %s171 = sor.u32 %s169, %s170
      %s172 = ssub.s32 %s28, %s37
      %s173 = sor.u32 %s171, %s172
      %p174 = scmp.eq.s32.totalorder %s173, 0
      %s176 = sadd.s32 %s175, 1
      %s177 = scalar_select %p174, %s175, %s176
      %p180 = pneg %p174
      %p181 = scmp.eq.s32.totalorder %s19, 1
      %p182 = por %p180, %p181
      %p183 = scmp.ne.s32.totalorder %s175, %s178
      %p184 = scmp.eq.s32.totalorder %s19, 0
      %p185 = por %p183, %p184
      %p186 = scmp.ne.s32.totalorder %s175, %s178
      %p187 = scmp.eq.s32.totalorder %s24, 1
      %p188 = por %p186, %p187
      %p189 = scmp.ne.s32.totalorder %s178, %s179
      %p190 = scmp.eq.s32.totalorder %s24, 0
      %p191 = por %p189, %p190
      %p192 = scmp.ne.s32.totalorder %s178, %s179
      %p193 = scmp.eq.s32.totalorder %s25, 1
      %p194 = por %p192, %p193
      %p196 = scmp.ne.s32.totalorder %s179, %s195
      %p197 = scmp.eq.s32.totalorder %s25, 0
      %p198 = por %p196, %p197
      %s199 = ssub.s32 %s26, %s45
      %s200 = ssub.s32 %s27, %s41
      %s201 = sor.u32 %s199, %s200
      %s202 = ssub.s32 %s28, %s37
      %s203 = sor.u32 %s201, %s202
      %p204 = scmp.eq.s32.totalorder %s203, 0
      %s206 = sadd.s32 %s205, 1
      %s207 = scalar_select %p204, %s205, %s206
      %p210 = pneg %p204
      %p211 = scmp.eq.s32.totalorder %s19, 1
      %p212 = por %p210, %p211
      %p213 = scmp.ne.s32.totalorder %s205, %s208
      %p214 = scmp.eq.s32.totalorder %s19, 0
      %p215 = por %p213, %p214
      %p216 = scmp.ne.s32.totalorder %s205, %s208
      %p217 = scmp.eq.s32.totalorder %s24, 1
      %p218 = por %p216, %p217
      %p219 = scmp.ne.s32.totalorder %s208, %s209
      %p220 = scmp.eq.s32.totalorder %s24, 0
      %p221 = por %p219, %p220
      %p222 = scmp.ne.s32.totalorder %s208, %s209
      %p223 = scmp.eq.s32.totalorder %s25, 1
      %p224 = por %p222, %p223
      %p226 = scmp.ne.s32.totalorder %s209, %s225
      %p227 = scmp.eq.s32.totalorder %s25, 0
      %p228 = por %p226, %p227
      %p229 = scmp.le.s32.totalorder 1, %s19
      %p230 = scmp.lt.s32.totalorder %s19, 3
      %p231 = pnand %p229, %p230
      %p232 = pneg %p231
      // Predicated region
      $region9: #{chroma_subsampling.1} parent=5 // pred_check
        _
      $region10: #{chroma_subsampling.1} parent=5 // pred_check_branch
        %234 = sbr.rel (%p231) target = $region12
      $region11: #{chroma_subsampling.1} parent=5 // pred_region
        %s235 = ssub.s32 %s19, 1
        // Predicated region
        $region13: #{chroma_subsampling.1} parent=11 // pred_check
          %p236 = pneg %p89
        $region14: #{chroma_subsampling.1} parent=11 // pred_check_branch
          %238 = sbr.rel (%p236) target = $region16
        $region15: #{chroma_subsampling.1} parent=11 // pred_region
          _
        $region16: #{chroma_subsampling.1} parent=11 // pred_fallthru
          _
        // Predicated region
        $region17: #{chroma_subsampling.1} parent=11 // pred_check
          %p239 = pneg %p110
        $region18: #{chroma_subsampling.1} parent=11 // pred_check_branch
          %241 = sbr.rel (%p239) target = $region20
        $region19: #{chroma_subsampling.1} parent=11 // pred_region
          _
        $region20: #{chroma_subsampling.1} parent=11 // pred_fallthru
          _
        // Predicated region
        $region21: #{chroma_subsampling.1} parent=11 // pred_check
          %p242 = pneg %p131
        $region22: #{chroma_subsampling.1} parent=11 // pred_check_branch
          %244 = sbr.rel (%p242) target = $region24
        $region23: #{chroma_subsampling.1} parent=11 // pred_region
          _
        $region24: #{chroma_subsampling.1} parent=11 // pred_fallthru
          _
      $region12: #{chroma_subsampling.1} parent=5 // pred_fallthru
        _
      %p245 = scmp.lt.s32.totalorder %s19, 2
      // Predicated region
      $region25: #{chroma_subsampling.1} parent=5 // pred_check
        %p246 = pneg %p245
      $region26: #{chroma_subsampling.1} parent=5 // pred_check_branch
        %248 = sbr.rel (%p246) target = $region28
      $region27: #{chroma_subsampling.1} parent=5 // pred_region
        // Predicated region
        $region29: #{chroma_subsampling.1} parent=27 // pred_check
          %p249 = pneg %p62
        $region30: #{chroma_subsampling.1} parent=27 // pred_check_branch
          %251 = sbr.rel (%p249) target = $region32
        $region31: #{chroma_subsampling.1} parent=27 // pred_region
          %s252 = smul.u32 2, %s27
          %p253 = scmp.lt.s32.totalorder %s26, 1
          %s254 = scalar_select %p253, %s26, 1
          %p255 = scmp.lt.s32.totalorder %s252, 1
          %s256 = scalar_select %p255, %s252, 1
          %p257 = scmp.lt.s32.totalorder %s28, 0
          %s258 = scalar_select %p257, %s28, 0
          %s259 = sadd.s32 %s258, %s256
          %s260 = smul.addr %s254, 2
          %s261 = sadd.s32 %s259, %s260
          %s262 = smul.addr %s261, 8
          %s263 = scalar_lea.vmem %s0, %s262
          %s264 = smul.u32 2, %s27
        $region32: #{chroma_subsampling.1} parent=27 // pred_fallthru
          _
      $region28: #{chroma_subsampling.1} parent=5 // pred_fallthru
        _
      %p265 = scmp.le.s32.totalorder 1, %s19
      %p266 = scmp.lt.s32.totalorder %s19, 3
      %p267 = pnand %p265, %p266
      %p268 = pneg %p267
      // Predicated region
      $region33: #{chroma_subsampling.1} parent=5 // pred_check
        _
      $region34: #{chroma_subsampling.1} parent=5 // pred_check_branch
        %270 = sbr.rel (%p267) target = $region36
      $region35: #{chroma_subsampling.1} parent=5 // pred_region
        %s271 = ssub.s32 %s19, 1
        %s272 = smul.u32 2, %s30
        %p273 = scmp.lt.s32.totalorder %s29, 1
        %s274 = scalar_select %p273, %s29, 1
        %p275 = scmp.lt.s32.totalorder %s272, 1
        %s276 = scalar_select %p275, %s272, 1
        %p277 = scmp.lt.s32.totalorder %s31, 0
        %s278 = scalar_select %p277, %s31, 0
        %s279 = sadd.s32 %s278, %s276
        %s280 = smul.addr %s274, 2
        %s281 = sadd.s32 %s279, %s280
        %s282 = smul.addr %s281, 8
        %s283 = scalar_lea.vmem %s0, %s282
        %p284 = pneg %p68
        %p285 = pneg %p65
        %p286 = pneg %p89
        %p287 = pneg %p86
        %p288 = pneg %p110
        %p289 = pneg %p107
        %p290 = pneg %p131
        %p291 = pneg %p128
        %p292 = pneg %p161
        %p293 = pneg %p158
        %s294 = sand.u32 %s148, 1
        %s295 = scalar_lea.sflag [#allocation3], %s294
        %s296 = sand.u32 %s148, 1
        %s297 = smul.addr %s296, 16
        %s298 = scalar_lea.vmem [#allocation2], %s297
        %p299 = pneg %p191
        %p300 = pneg %p188
        %s301 = sand.u32 %s24, 1
        %s302 = scalar_lea.sflag [#allocation5], %s301
        %s303 = sand.u32 %s178, 1
        %s304 = smul.addr %s303, 8
        %s305 = scalar_lea.vmem [#allocation4], %s304
        %p306 = pneg %p221
        %p307 = pneg %p218
        %s308 = sand.u32 %s24, 1
        %s309 = scalar_lea.sflag [#allocation5], %s308
        %s310 = sand.u32 %s208, 1
        %s311 = smul.addr %s310, 8
        %s312 = scalar_lea.vmem [#allocation6], %s311
        %s313 = smul.u32 2, %s30
        %p314 = scmp.lt.s32.totalorder %s29, 1
        %s315 = scalar_select %p314, %s29, 1
        %p316 = scmp.lt.s32.totalorder %s313, 1
        %s317 = scalar_select %p316, %s313, 1
        %p318 = scmp.lt.s32.totalorder %s31, 0
        %s319 = scalar_select %p318, %s31, 0
        %s320 = sadd.s32 %s319, %s317
        %s321 = smul.addr %s315, 2
        %s322 = sadd.s32 %s320, %s321
        %s323 = smul.addr %s322, 8
        %s324 = scalar_lea.vmem %s0, %s323
        %s325 = smul.u32 2, %s30
        %s326 = smul.u32 2, %s30
        %v328 = vld [vmem:[%s324] sm:$0xff]
        %v329 = vld [vmem:[%s324 + $0x8] sm:$0xff]
        %v330 = vpack.c.bf16 %v328, %v328
        %v331 = vpack.c.bf16 %v329, %v329
        %v332 = vunpack.c.l.bf16 %v330
        %v333 = vunpack.c.l.bf16 %v331
        %v334 = vsub.f32 %v328, %v332
        %v335 = vsub.f32 %v329, %v333
        %v336 = vpack.c.bf16 %v334, %v334
        %v337 = vpack.c.bf16 %v335, %v335
        %v338 = vunpack.c.l.bf16 %v336
        %v339 = vunpack.c.l.bf16 %v337
        %v340 = vsub.f32 %v334, %v338
        %v341 = vsub.f32 %v335, %v339
        %v342 = vpack.c.bf16 %v341, %v340
        %v343 = vld [vmem:[%s1] sm:$0xf]
        %v344 = vld [vmem:[%s1 + $0x4] sm:$0xf]
        %v345 = vld [vmem:[%s1 + $0x8] sm:$0xf]
        %v346 = vld [vmem:[%s1 + $0xc] sm:$0xf]
        %v347 = vld [vmem:[%s1 + $0x10] sm:$0xf]
        %v348 = vld [vmem:[%s1 + $0x14] sm:$0xf]
        %v351 = vunpack.c.l.b16 %v336
        %v352 = vunpack.c.l.b16 %v337
        %v353 = vpack.c.b16 %v352, %v351
        %v360 = vunpack.c.l.b16 %v343
        %v361 = vunpack.c.l.b16 %v344
        %v362 = vunpack.c.l.b16 %v345
        %v363 = vunpack.c.l.b16 %v346
        %v364 = vunpack.c.l.b16 %v347
        %v365 = vunpack.c.l.b16 %v348
        %v366 = vpack.c.b16 %v361, %v360
        %v367 = vpack.c.b16 %v363, %v362
        %v368 = vpack.c.b16 %v365, %v364
        %vm372 = vcmask 392192
        %v374 = vsel %vm372, %v353, 0
        %376 = vmatpush.bf16.msra.mxu0 0
        %377 = vmatpush.bf16.msra.mxu0 0
        %378 = vmatpush.bf16.msra.mxu0 0
        %379 = vmatpush.bf16.msra.mxu0 0
        %380 = vmatpush.bf16.msra.mxu0 0
        %381 = vmatpush.bf16.msra.mxu0 %v368
        %382 = vmatpush.bf16.msra.mxu0 %v367
        %383 = vmatpush.bf16.msra.mxu0 %v366
        %384 = vmatmul.bf16.gmra.mxu0 %v374
        %v385 = vpop.f32.mrf.mxu0
        %v386 = vadd.f32 0.0, %v385
        %v387 = vpop.f32.mrf.mxu0
        %v388 = vadd.f32 0.0, %v387
        %389 = vdwg.mxu0
        %v392 = vunpack.c.l.b16 %v330
        %v393 = vunpack.c.l.b16 %v331
        %v394 = vpack.c.b16 %v393, %v392
        %v396 = vsel %vm372, %v394, 0
        %398 = vmatpush.bf16.msra.mxu0 0
        %399 = vmatpush.bf16.msra.mxu0 0
        %400 = vmatpush.bf16.msra.mxu0 0
        %401 = vmatpush.bf16.msra.mxu0 0
        %402 = vmatpush.bf16.msra.mxu0 0
        %403 = vmatpush.bf16.msra.mxu0 %v368
        %404 = vmatpush.bf16.msra.mxu0 %v367
        %405 = vmatpush.bf16.msra.mxu0 %v366
        %406 = vmatmul.bf16.gmra.mxu0 %v396
        %v407 = vpop.f32.mrf.mxu0
        %v408 = vadd.f32 %v386, %v407
        %v409 = vpop.f32.mrf.mxu0
        %v410 = vadd.f32 %v388, %v409
        %411 = vdwg.mxu0
        %v413 = vsel %vm372, %v342, 0
        %415 = vmatpush.bf16.msra.mxu0 0
        %416 = vmatpush.bf16.msra.mxu0 0
        %417 = vmatpush.bf16.msra.mxu0 0
        %418 = vmatpush.bf16.msra.mxu0 0
        %419 = vmatpush.bf16.msra.mxu0 0
        %420 = vmatpush.bf16.msra.mxu0 %v368
        %421 = vmatpush.bf16.msra.mxu0 %v367
        %422 = vmatpush.bf16.msra.mxu0 %v366
        %423 = vmatmul.bf16.gmra.mxu0 %v413
        %v424 = vpop.f32.mrf.mxu0
        %v425 = vadd.f32 0.0, %v424
        %v426 = vpop.f32.mrf.mxu0
        %v427 = vadd.f32 0.0, %v426
        %428 = vdwg.mxu0
        %v429 = vadd.f32 %v408, %v425
        %v430 = vadd.f32 %v410, %v427
        %vm431 = vcmask 130048
        %432 = vst.msk [vmem:[%s298] sm:$0xff] %vm431, %v429
        %433 = vst.msk [vmem:[%s298 + $0x8] sm:$0xff] %vm431, %v430
        %v434 = vld [vmem:[%s324] ss:$2 sm:$0xff]
        %s435 = scalar_lea.vmem %s324, 1
        %v436 = vld [vmem:[%s435] ss:$2 sm:$0xff]
        %v437 = vadd.f32 %v434, %v436
        %v438 = vpack.c.bf16 %v437, %v437
        %v439 = vunpack.c.l.bf16 %v438
        %v440 = vsub.f32 %v437, %v439
        %v441 = vpack.c.bf16 %v440, %v440
        %v442 = vunpack.c.l.bf16 %v441
        %v443 = vsub.f32 %v440, %v442
        %v444 = vpack.c.bf16 %v443, %v443
        %v445 = vld [vmem:[%s2] sm:$0xf]
        %v446 = vld [vmem:[%s2 + $0x4] sm:$0xf]
        %v447 = vld [vmem:[%s2 + $0x8] sm:$0xf]
        %v448 = vld [vmem:[%s2 + $0xc] sm:$0xf]
        %v449 = vld [vmem:[%s2 + $0x10] sm:$0xf]
        %v450 = vld [vmem:[%s2 + $0x14] sm:$0xf]
        %v457 = vunpack.c.l.b16 %v445
        %v458 = vunpack.c.l.b16 %v446
        %v459 = vunpack.c.l.b16 %v447
        %v460 = vunpack.c.l.b16 %v448
        %v461 = vunpack.c.l.b16 %v449
        %v462 = vunpack.c.l.b16 %v450
        %v463 = vpack.c.b16 %v458, %v457
        %v464 = vpack.c.b16 %v460, %v459
        %v465 = vpack.c.b16 %v462, %v461
        %v470 = vsel %vm372, %v441, 0
        %472 = vmatpush.bf16.msra.mxu0 0
        %473 = vmatpush.bf16.msra.mxu0 0
        %474 = vmatpush.bf16.msra.mxu0 0
        %475 = vmatpush.bf16.msra.mxu0 0
        %476 = vmatpush.bf16.msra.mxu0 0
        %477 = vmatpush.bf16.msra.mxu0 %v465
        %478 = vmatpush.bf16.msra.mxu0 %v464
        %479 = vmatpush.bf16.msra.mxu0 %v463
        %480 = vmatmul.bf16.gmra.mxu0 %v470
        %v481 = vpop.f32.mrf.mxu0
        %v482 = vadd.f32 0.0, %v481
        %v483 = vpop.f32.mrf.mxu0
        %484 = vdwg.mxu0
        %v486 = vsel %vm372, %v438, 0
        %488 = vmatpush.bf16.msra.mxu0 0
        %489 = vmatpush.bf16.msra.mxu0 0
        %490 = vmatpush.bf16.msra.mxu0 0
        %491 = vmatpush.bf16.msra.mxu0 0
        %492 = vmatpush.bf16.msra.mxu0 0
        %493 = vmatpush.bf16.msra.mxu0 %v465
        %494 = vmatpush.bf16.msra.mxu0 %v464
        %495 = vmatpush.bf16.msra.mxu0 %v463
        %496 = vmatmul.bf16.gmra.mxu0 %v486
        %v497 = vpop.f32.mrf.mxu0
        %v498 = vadd.f32 %v482, %v497
        %v499 = vpop.f32.mrf.mxu0
        %500 = vdwg.mxu0
        %v502 = vsel %vm372, %v444, 0
        %504 = vmatpush.bf16.msra.mxu0 0
        %505 = vmatpush.bf16.msra.mxu0 0
        %506 = vmatpush.bf16.msra.mxu0 0
        %507 = vmatpush.bf16.msra.mxu0 0
        %508 = vmatpush.bf16.msra.mxu0 0
        %509 = vmatpush.bf16.msra.mxu0 %v465
        %510 = vmatpush.bf16.msra.mxu0 %v464
        %511 = vmatpush.bf16.msra.mxu0 %v463
        %512 = vmatmul.bf16.gmra.mxu0 %v502
        %v513 = vpop.f32.mrf.mxu0
        %v514 = vadd.f32 0.0, %v513
        %v515 = vpop.f32.mrf.mxu0
        %516 = vdwg.mxu0
        %v517 = vadd.f32 %v498, %v514
        %v518 = vmul.f32 %v517, 0.25
        %vm519 = vcmask 64512
        %520 = vst.msk [vmem:[%s305] sm:$0xff] %vm519, %v518
        %v521 = vld [vmem:[%s3] sm:$0xf]
        %v522 = vld [vmem:[%s3 + $0x4] sm:$0xf]
        %v523 = vld [vmem:[%s3 + $0x8] sm:$0xf]
        %v524 = vld [vmem:[%s3 + $0xc] sm:$0xf]
        %v525 = vld [vmem:[%s3 + $0x10] sm:$0xf]
        %v526 = vld [vmem:[%s3 + $0x14] sm:$0xf]
        %v533 = vunpack.c.l.b16 %v521
        %v534 = vunpack.c.l.b16 %v522
        %v535 = vunpack.c.l.b16 %v523
        %v536 = vunpack.c.l.b16 %v524
        %v537 = vunpack.c.l.b16 %v525
        %v538 = vunpack.c.l.b16 %v526
        %v539 = vpack.c.b16 %v534, %v533
        %v540 = vpack.c.b16 %v536, %v535
        %v541 = vpack.c.b16 %v538, %v537
        %545 = vmatpush.bf16.msra.mxu0 0
        %546 = vmatpush.bf16.msra.mxu0 0
        %547 = vmatpush.bf16.msra.mxu0 0
        %548 = vmatpush.bf16.msra.mxu0 0
        %549 = vmatpush.bf16.msra.mxu0 0
        %550 = vmatpush.bf16.msra.mxu0 %v541
        %551 = vmatpush.bf16.msra.mxu0 %v540
        %552 = vmatpush.bf16.msra.mxu0 %v539
        %553 = vmatmul.bf16.gmra.mxu0 %v470
        %v554 = vpop.f32.mrf.mxu0
        %v555 = vadd.f32 0.0, %v554
        %v556 = vpop.f32.mrf.mxu0
        %557 = vdwg.mxu0
        %558 = vmatpush.bf16.msra.mxu0 0
        %559 = vmatpush.bf16.msra.mxu0 0
        %560 = vmatpush.bf16.msra.mxu0 0
        %561 = vmatpush.bf16.msra.mxu0 0
        %562 = vmatpush.bf16.msra.mxu0 0
        %563 = vmatpush.bf16.msra.mxu0 %v541
        %564 = vmatpush.bf16.msra.mxu0 %v540
        %565 = vmatpush.bf16.msra.mxu0 %v539
        %566 = vmatmul.bf16.gmra.mxu0 %v486
        %v567 = vpop.f32.mrf.mxu0
        %v568 = vadd.f32 %v555, %v567
        %v569 = vpop.f32.mrf.mxu0
        %570 = vdwg.mxu0
        %571 = vmatpush.bf16.msra.mxu0 0
        %572 = vmatpush.bf16.msra.mxu0 0
        %573 = vmatpush.bf16.msra.mxu0 0
        %574 = vmatpush.bf16.msra.mxu0 0
        %575 = vmatpush.bf16.msra.mxu0 0
        %576 = vmatpush.bf16.msra.mxu0 %v541
        %577 = vmatpush.bf16.msra.mxu0 %v540
        %578 = vmatpush.bf16.msra.mxu0 %v539
        %579 = vmatmul.bf16.gmra.mxu0 %v502
        %v580 = vpop.f32.mrf.mxu0
        %v581 = vadd.f32 0.0, %v580
        %v582 = vpop.f32.mrf.mxu0
        %583 = vdwg.mxu0
        %v584 = vadd.f32 %v568, %v581
        %v585 = vmul.f32 %v584, 0.25
        %586 = vst.msk [vmem:[%s312] sm:$0xff] %vm519, %v585
        %s587 = sand.u32 %s148, 1
        %s588 = scalar_lea.sflag [#allocation3], %s587
        %s589 = sand.u32 %s148, 1
        %s590 = smul.addr %s589, 16
        %s591 = scalar_lea.vmem [#allocation2], %s590
        %s592 = sand.u32 %s24, 1
        %s593 = scalar_lea.sflag [#allocation5], %s592
        %s594 = sand.u32 %s178, 1
        %s595 = smul.addr %s594, 8
        %s596 = scalar_lea.vmem [#allocation4], %s595
        %s597 = sand.u32 %s24, 1
        %s598 = scalar_lea.sflag [#allocation5], %s597
        %s599 = sand.u32 %s208, 1
        %s600 = smul.addr %s599, 8
        %s601 = scalar_lea.vmem [#allocation6], %s600
        // Predicated region
        $region37: #{chroma_subsampling.1} parent=35 // pred_check
          %p602 = pneg %p158
        $region38: #{chroma_subsampling.1} parent=35 // pred_check_branch
          %604 = sbr.rel (%p602) target = $region40
        $region39: #{chroma_subsampling.1} parent=35 // pred_region
          %s605 = smul.u32 2, %s30
          %607 = vsyncadd %s588, 0
          %s608 = sadd.s32 %s31, %s605
          %s609 = smul.addr %s29, 2
          %s610 = sadd.s32 %s608, %s609
          %s611 = smul.addr %s610, 8
          %s612 = scalar_lea.hbm %s4, %s611
          %s613 = sshll.u32 %s591, 4
          %s614 = int_to_ptr.vmem [resolvable:$true] %s613
          %s615 = sshll.u32 %s612, 4
          %s616 = int_to_ptr.hbm [resolvable:$true] %s615
          %621 = dma.vmem_to_hbm [thread:$0]  %s614, 256, %s616, %s588, 128, 128, 8
        $region40: #{chroma_subsampling.1} parent=35 // pred_fallthru
          _
        // Predicated region
        $region41: #{chroma_subsampling.1} parent=35 // pred_check
          %p622 = pneg %p188
        $region42: #{chroma_subsampling.1} parent=35 // pred_check_branch
          %624 = sbr.rel (%p622) target = $region44
        $region43: #{chroma_subsampling.1} parent=35 // pred_region
          %626 = vsyncadd %s593, 0
          %s627 = sadd.s32 %s31, %s30
          %s628 = sadd.s32 %s627, %s29
          %s629 = smul.addr %s628, 8
          %s630 = scalar_lea.hbm %s5, %s629
          %s632 = sshll.u32 %s596, 4
          %s633 = int_to_ptr.vmem [resolvable:$true] %s632
          %s634 = sshll.u32 %s630, 4
          %s635 = int_to_ptr.hbm [resolvable:$true] %s634
          %637 = dma.vmem_to_hbm [thread:$0]  %s633, 128, %s635, %s593
        $region44: #{chroma_subsampling.1} parent=35 // pred_fallthru
          _
        // Predicated region
        $region45: #{chroma_subsampling.1} parent=35 // pred_check
          %p638 = pneg %p218
        $region46: #{chroma_subsampling.1} parent=35 // pred_check_branch
          %640 = sbr.rel (%p638) target = $region48
        $region47: #{chroma_subsampling.1} parent=35 // pred_region
          %642 = vsyncadd %s598, 0
          %s643 = sadd.s32 %s31, %s30
          %s644 = sadd.s32 %s643, %s29
          %s645 = smul.addr %s644, 8
          %s646 = scalar_lea.hbm %s6, %s645
          %s648 = sshll.u32 %s601, 4
          %s649 = int_to_ptr.vmem [resolvable:$true] %s648
          %s650 = sshll.u32 %s646, 4
          %s651 = int_to_ptr.hbm [resolvable:$true] %s650
          %653 = dma.vmem_to_hbm [thread:$0]  %s649, 128, %s651, %s598
        $region48: #{chroma_subsampling.1} parent=35 // pred_fallthru
          _
      $region36: #{chroma_subsampling.1} parent=5 // pred_fallthru
        _
      %p654 = scmp.le.s32.totalorder 2, %s19
      // Predicated region
      $region49: #{chroma_subsampling.1} parent=5 // pred_check
        %p655 = pneg %p654
      $region50: #{chroma_subsampling.1} parent=5 // pred_check_branch
        %657 = sbr.rel (%p655) target = $region52
      $region51: #{chroma_subsampling.1} parent=5 // pred_region
        %s658 = ssub.s32 %s19, 2
        // Predicated region
        $region53: #{chroma_subsampling.1} parent=51 // pred_check
          %p659 = pneg %p164
        $region54: #{chroma_subsampling.1} parent=51 // pred_check_branch
          %661 = sbr.rel (%p659) target = $region56
        $region55: #{chroma_subsampling.1} parent=51 // pred_region
          %s662 = sand.u32 %s149, 1
          %s663 = scalar_lea.sflag [#allocation3], %s662
          %s664 = sand.u32 %s149, 1
          %s665 = smul.addr %s664, 16
          %s666 = scalar_lea.vmem [#allocation2], %s665
          %668 = dma.done %s663, 256
        $region56: #{chroma_subsampling.1} parent=51 // pred_fallthru
          _
        // Predicated region
        $region57: #{chroma_subsampling.1} parent=51 // pred_check
          %p669 = pneg %p194
        $region58: #{chroma_subsampling.1} parent=51 // pred_check_branch
          %671 = sbr.rel (%p669) target = $region60
        $region59: #{chroma_subsampling.1} parent=51 // pred_region
          %s672 = sand.u32 %s25, 1
          %s673 = scalar_lea.sflag [#allocation5], %s672
          %s674 = sand.u32 %s179, 1
          %s675 = smul.addr %s674, 8
          %s676 = scalar_lea.vmem [#allocation4], %s675
          %678 = dma.done %s673, 128
        $region60: #{chroma_subsampling.1} parent=51 // pred_fallthru
          _
        // Predicated region
        $region61: #{chroma_subsampling.1} parent=51 // pred_check
          %p679 = pneg %p224
        $region62: #{chroma_subsampling.1} parent=51 // pred_check_branch
          %681 = sbr.rel (%p679) target = $region64
        $region63: #{chroma_subsampling.1} parent=51 // pred_region
          %s682 = sand.u32 %s25, 1
          %s683 = scalar_lea.sflag [#allocation5], %s682
          %s684 = sand.u32 %s209, 1
          %s685 = smul.addr %s684, 8
          %s686 = scalar_lea.vmem [#allocation6], %s685
          %688 = dma.done %s683, 128
        $region64: #{chroma_subsampling.1} parent=51 // pred_fallthru
          _
      $region52: #{chroma_subsampling.1} parent=5 // pred_fallthru
        _
    $region6: #{chroma_subsampling.1} parent=1 // loop_footer
      %s23 = sadd.s32 1, %s19
    $region7: #{chroma_subsampling.1} parent=1 // loop_footer_branch
      %18 = sbr.rel target = $region3
    $region8: #{chroma_subsampling.1} parent=1 // loop_exit
      _
    %689 = vsyncpa [#allocation3], 1
    %s690 = scalar_lea.sflag [#allocation3], 1
    %691 = vsyncpa %s690, 1
    %692 = vsyncpa [#allocation5], 1
    %s693 = scalar_lea.sflag [#allocation5], 1
    %694 = vsyncpa %s693, 1

</llo_original>
